<compile_context>
chip_gen: v5e
topology: v5e:2x2
jax: 0.10.0
libtpu: 0.0.40
codegen_flags: <defaults>
</compile_context>

<pallas_src>
import jax
import jax.numpy as jnp
from jax.experimental import pallas as pl
from jax.experimental.pallas import tpu as pltpu

IN_FEATURES = 13
HIDDEN = 100
OUT_FEATURES = 1


def _round_up(n, m):
    return ((n + m - 1) // m) * m


def _ffd_h_kernel(x_ref, w1_ref, b1_ref, w2_ref, b2_ref, o_ref):
    # In-kernel float() cast (mirrors `x.float()`), avoids a separate HBM pass.
    xf = x_ref[...].astype(jnp.float32)                      # (TB, 13)

    # Hidden layer, batch-on-lanes: (100, 13) x (TB, 13)^T -> (100, TB).
    # NT-form dot_general (both operands contract on their last dim) -> MXU.
    h = jax.lax.dot_general(
        w1_ref[...], xf,
        dimension_numbers=(((1,), (1,)), ((), ())),
        preferred_element_type=jnp.float32,
    )
    h = jnp.maximum(h + b1_ref[...], 0.0)                    # b1 (100,1) bcast over lanes

    # Prediction layer, still lane-dense: (1, 100) @ (100, TB) -> (1, TB).
    y = jnp.dot(w2_ref[...], h, preferred_element_type=jnp.float32)
    y = y + b2_ref[0]                                        # scalar bias from SMEM
    o_ref[...] = y.astype(o_ref.dtype)


def ffd_h_forward(x, w1, b1, w2, b2, *, block_rows=8192):
    """Forward pass of ffd_h.

    x  : (B, 13), any float/int dtype (cast to f32 in-kernel, like x.float()).
    w1 : (100, 13)   -- PyTorch Linear weight layout (out_features, in_features)
    b1 : (100, 1)
    w2 : (1, 100)
    b2 : (1,)
    Returns (B, 1) float32.
    """
    B = x.shape[0]
    assert x.shape[1] == IN_FEATURES

    # Batch tile: multiple of 128 so the batch-on-lanes output is lane-dense.
    # 8192 rows keeps double-buffered input + scratch well under the v7x
    # 32 MiB scoped-VMEM default; on v5e/v6e (128 MiB VMEM) block_rows can be
    # raised to 16K-32K (with vmem_limit_bytes bumped if needed).
    tb = min(int(block_rows), _round_up(B, 128))
    tb = _round_up(tb, 128)
    Bp = _round_up(B, tb)
    num_tiles = Bp // tb

    xp = x if Bp == B else jnp.pad(x, ((0, Bp - B), (0, 0)))

    bytes_accessed = (
        xp.size * xp.dtype.itemsize                 # input rows
        + Bp * 4                                    # lane-dense output
        + (w1.size + b1.size + w2.size + b2.size) * 4
    )
    cost = pl.CostEstimate(
        flops=2 * Bp * (IN_FEATURES * HIDDEN + HIDDEN),
        transcendentals=0,
        bytes_accessed=bytes_accessed,
    )

    out = pl.pallas_call(
        _ffd_h_kernel,
        out_shape=jax.ShapeDtypeStruct((1, Bp), jnp.float32),
        grid=(num_tiles,),
        in_specs=[
            pl.BlockSpec((tb, IN_FEATURES), lambda i: (i, 0)),      # x tile
            pl.BlockSpec((HIDDEN, IN_FEATURES), lambda i: (0, 0)),  # w1 (resident)
            pl.BlockSpec((HIDDEN, 1), lambda i: (0, 0)),            # b1 (resident)
            pl.BlockSpec((OUT_FEATURES, HIDDEN), lambda i: (0, 0)), # w2 (resident)
            pl.BlockSpec(memory_space=pltpu.MemorySpace.SMEM),      # b2 scalar
        ],
        out_specs=pl.BlockSpec((1, tb), lambda i: (0, i)),          # lane-dense out
        compiler_params=pltpu.CompilerParams(
            dimension_semantics=("parallel",),
        ),
        cost_estimate=cost,
    )(xp, w1, b1, w2, b2)

    # (1, Bp) -> (Bp, 1): column j is batch row j, so the reshape keeps order.
    return out.reshape(Bp, 1)[:B]


def init_params(key):
    """PyTorch-default-style init, stored directly in PyTorch (out, in) layout."""
    k1, k2, k3, k4 = jax.random.split(key, 4)
    bound1 = 1.0 / (IN_FEATURES ** 0.5)
    bound2 = 1.0 / (HIDDEN ** 0.5)
    w1 = jax.random.uniform(k1, (HIDDEN, IN_FEATURES), jnp.float32, -bound1, bound1)
    b1 = jax.random.uniform(k2, (HIDDEN, 1), jnp.float32, -bound1, bound1)
    w2 = jax.random.uniform(k3, (OUT_FEATURES, HIDDEN), jnp.float32, -bound2, bound2)
    b2 = jax.random.uniform(k4, (OUT_FEATURES,), jnp.float32, -bound2, bound2)
    return w1, b1, w2, b2


def reference_forward(x, w1, b1, w2, b2):
    xf = x.astype(jnp.float32)
    h = jnp.maximum(
        jnp.dot(xf, w1.T, precision=jax.lax.Precision.HIGHEST) + b1[:, 0], 0.0)
    return jnp.dot(h, w2.T, precision=jax.lax.Precision.HIGHEST) + b2[None, :]


if __name__ == "__main__":
    key = jax.random.PRNGKey(0)
    k_params, k_x1, k_x2 = jax.random.split(key, 3)
    w1, b1, w2, b2 = init_params(k_params)

    # Small batch (exercises the tail-padding path: 37 rows -> one 128-row tile).
    x1 = jax.random.normal(k_x1, (37, IN_FEATURES), jnp.float32)
    y1 = jax.block_until_ready(ffd_h_forward(x1, w1, b1, w2, b2))
    r1 = reference_forward(x1, w1, b1, w2, b2)
    assert y1.shape == (37, 1)
    assert jnp.allclose(y1, r1, atol=1e-4, rtol=1e-4), "mismatch vs reference (single tile)"

    # Multi-tile batch (grid > 1) with a small forced tile size.
    x2 = jax.random.normal(k_x2, (300, IN_FEATURES), jnp.float32)
    y2 = jax.block_until_ready(ffd_h_forward(x2, w1, b1, w2, b2, block_rows=128))
    r2 = reference_forward(x2, w1, b1, w2, b2)
    assert y2.shape == (300, 1)
    assert jnp.allclose(y2, r2, atol=1e-4, rtol=1e-4), "mismatch vs reference (multi tile)"

    print("KERNEL_OK")
</pallas_src>

<mosaic_0001>
module attributes {stable_mosaic.version = 11 : i64} {
  func.func @_ffd_h_kernel(%arg0: i32, %arg1: memref<128x13xf32, #tpu.memory_space<vmem>>, %arg2: memref<100x13xf32, #tpu.memory_space<vmem>>, %arg3: memref<100x1xf32, #tpu.memory_space<vmem>>, %arg4: memref<1x100xf32, #tpu.memory_space<vmem>>, %arg5: memref<1xf32, #tpu.memory_space<smem>>, %arg6: memref<1x128xf32, #tpu.memory_space<vmem>>) attributes {dimension_semantics = [#tpu.dimension_semantics<parallel>], iteration_bounds = array<i64: 1>, scalar_prefetch = 0 : i64, scratch_operands = 0 : i64, tpu.core_type = #tpu.core_type<tc>, window_params = [{transform_indices = @transform_0, window_bounds = array<i64: 128, 13>}, {pipeline_mode = #tpu.pipeline_mode<synchronous>, transform_indices = @transform_1, window_bounds = array<i64: 100, 13>}, {pipeline_mode = #tpu.pipeline_mode<synchronous>, transform_indices = @transform_2, window_bounds = array<i64: 100, 1>}, {pipeline_mode = #tpu.pipeline_mode<synchronous>, transform_indices = @transform_3, window_bounds = array<i64: 1, 100>}, {transform_indices = @transform_4, window_bounds = array<i64: 1>}, {transform_indices = @transform_5, window_bounds = array<i64: 1, 128>}]} {
    %c0 = arith.constant 0 : index
    %c0_0 = arith.constant 0 : index
    %0 = vector.load %arg1[%c0, %c0_0] : memref<128x13xf32, #tpu.memory_space<vmem>>, vector<128x13xf32>
    %c0_1 = arith.constant 0 : index
    %c0_2 = arith.constant 0 : index
    %1 = vector.load %arg2[%c0_1, %c0_2] : memref<100x13xf32, #tpu.memory_space<vmem>>, vector<100x13xf32>
    %cst = arith.constant dense<0.000000e+00> : vector<100x128xf32>
    %2 = tpu.matmul %1, %0, %cst {dimension_numbers = #tpu.dot_dimension_numbers<[1], [1], [0], [0], [0, 0, 1, 0], [], []>} : vector<100x13xf32>, vector<128x13xf32>, vector<100x128xf32> -> vector<100x128xf32>
    %c0_3 = arith.constant 0 : index
    %c0_4 = arith.constant 0 : index
    %3 = vector.load %arg3[%c0_3, %c0_4] : memref<100x1xf32, #tpu.memory_space<vmem>>, vector<100x1xf32>
    %4 = vector.broadcast %3 : vector<100x1xf32> to vector<100x128xf32>
    %5 = arith.addf %2, %4 : vector<100x128xf32>
    %cst_5 = arith.constant 0.000000e+00 : f32
    %6 = vector.broadcast %cst_5 : f32 to vector<100x128xf32>
    %7 = arith.maximumf %5, %6 : vector<100x128xf32>
    %c0_6 = arith.constant 0 : index
    %c0_7 = arith.constant 0 : index
    %8 = vector.load %arg4[%c0_6, %c0_7] : memref<1x100xf32, #tpu.memory_space<vmem>>, vector<1x100xf32>
    %cst_8 = arith.constant dense<0.000000e+00> : vector<1x128xf32>
    %9 = tpu.matmul %8, %7, %cst_8 {dimension_numbers = #tpu.dot_dimension_numbers<[1], [0], [0], [1], [0, 0, 1, 1], [], []>} : vector<1x100xf32>, vector<100x128xf32>, vector<1x128xf32> -> vector<1x128xf32>
    %c0_9 = arith.constant 0 : index
    %10 = memref.load %arg5[%c0_9] : memref<1xf32, #tpu.memory_space<smem>>
    %11 = vector.broadcast %10 : f32 to vector<1x128xf32>
    %12 = arith.addf %9, %11 : vector<1x128xf32>
    %c0_10 = arith.constant 0 : index
    %c0_11 = arith.constant 0 : index
    %13 = vector.load %arg6[%c0_10, %c0_11] : memref<1x128xf32, #tpu.memory_space<vmem>>, vector<1x128xf32>
    tpu.vector_store %arg6[%c0_10, %c0_11], %12 {strides = array<i32>} : memref<1x128xf32, #tpu.memory_space<vmem>>, vector<1x128xf32>,
    return
  }
  func.func @transform_0(%arg0: i32) -> (i32, i32) {
    %c0_i32 = arith.constant 0 : i32
    %c0_i32_0 = arith.constant 0 : i32
    return %arg0, %c0_i32 : i32, i32
  }
  func.func @transform_1(%arg0: i32) -> (i32, i32) {
    %c0_i32 = arith.constant 0 : i32
    %c0_i32_0 = arith.constant 0 : i32
    %c0_i32_1 = arith.constant 0 : i32
    return %c0_i32, %c0_i32_0 : i32, i32
  }
  func.func @transform_2(%arg0: i32) -> (i32, i32) {
    %c0_i32 = arith.constant 0 : i32
    %c0_i32_0 = arith.constant 0 : i32
    %c0_i32_1 = arith.constant 0 : i32
    return %c0_i32, %c0_i32_0 : i32, i32
  }
  func.func @transform_3(%arg0: i32) -> (i32, i32) {
    %c0_i32 = arith.constant 0 : i32
    %c0_i32_0 = arith.constant 0 : i32
    %c0_i32_1 = arith.constant 0 : i32
    return %c0_i32, %c0_i32_0 : i32, i32
  }
  func.func @transform_4(%arg0: i32) -> i32 {
    %c0_i32 = arith.constant 0 : i32
    %c0_i32_0 = arith.constant 0 : i32
    return %c0_i32 : i32
  }
  func.func @transform_5(%arg0: i32) -> (i32, i32) {
    %c0_i32 = arith.constant 0 : i32
    %c0_i32_0 = arith.constant 0 : i32
    return %c0_i32, %arg0 : i32, i32
  }
}

</mosaic_0001>

<llo_original>
// kernel: tpu_custom_call.1
$region0: #{tpu_custom_call.1}
  #allocation0 [shape = 'u32[]', space=smem, size = 0x4, offset = 0x4, fixed_abs, tag = 'smem constant byte address 0x4 - core index']
  #allocation1 [shape = 'u32[72,128]{1,0:T(1,128)}', space=vmem, size = 0x9000, scoped, tag = 'internal scratch']
  #allocation2 [shape = 'f32[1]{0:T(128)S(6)}', space=smem, size = 0x200, scoped, tag = 'scoped memory for tpu_custom_call.1']
  %s0 = inlined_call_operand.vmem [shape: f32[128,13], index: 0, kind: input, shape index: {}]
  %s1 = inlined_call_operand.vmem [shape: f32[100,13], index: 1, kind: input, shape index: {}]
  %s2 = inlined_call_operand.vmem [shape: f32[100,1], index: 2, kind: input, shape index: {}]
  %s3 = inlined_call_operand.vmem [shape: f32[1,100], index: 3, kind: input, shape index: {}]
  %s4 = inlined_call_operand.<no memory space> [shape: f32[1], index: 4, kind: input, shape index: {}]
  %s5 = inlined_call_operand.hbm [shape: f32[1,128], index: 5, kind: output, shape index: {}]
  %s6 = sld [smem:[#allocation0]]
  $region30: #{tpu_custom_call.1} parent=0
    _
  %s8 = ssub.s32 1, %s6
  %s9 = scalar_select 0, %s8, %s6
  %10 = sst [smem:[#allocation2]] %s4
  $region1: #{tpu_custom_call.1} parent=0
    #allocation3 [shape = 'u8[512]{0}', space=vmem, size = 0x400, scoped, tag = 'output window, operand 0, single buffered']
    #allocation4 [shape = 's32[1]{0}', space=sflag, size = 0x4, scoped, tag = 'scoped memory for tpu_custom_call.1']
    %11 = vsyncpa [#allocation4], 0
    // Predicated region
    $region2: #{tpu_custom_call.1} parent=1 // pred_check
      _
    $region3: #{tpu_custom_call.1} parent=1 // pred_check_branch
      %13 = sbr.rel (0) target = $region5
    $region4: #{tpu_custom_call.1} parent=1 // pred_region
      _
    $region5: #{tpu_custom_call.1} parent=1 // pred_fallthru
      _
    // Predicated region
    $region6: #{tpu_custom_call.1} parent=1 // pred_check
      _
    $region7: #{tpu_custom_call.1} parent=1 // pred_check_branch
      %15 = sbr.rel (0) target = $region9
    $region8: #{tpu_custom_call.1} parent=1 // pred_region
      _
    $region9: #{tpu_custom_call.1} parent=1 // pred_fallthru
      _
    // Predicated region
    $region10: #{tpu_custom_call.1} parent=1 // pred_check
      _
    $region11: #{tpu_custom_call.1} parent=1 // pred_check_branch
      %17 = sbr.rel (0) target = $region13
    $region12: #{tpu_custom_call.1} parent=1 // pred_region
      _
    $region13: #{tpu_custom_call.1} parent=1 // pred_fallthru
      _
    // Predicated region
    $region14: #{tpu_custom_call.1} parent=1 // pred_check
      _
    $region15: #{tpu_custom_call.1} parent=1 // pred_check_branch
      %19 = sbr.rel (0) target = $region17
    $region16: #{tpu_custom_call.1} parent=1 // pred_region
      _
    $region17: #{tpu_custom_call.1} parent=1 // pred_fallthru
      _
    // Predicated region
    $region18: #{tpu_custom_call.1} parent=1 // pred_check
      _
    $region19: #{tpu_custom_call.1} parent=1 // pred_check_branch
      %21 = sbr.rel (0) target = $region21
    $region20: #{tpu_custom_call.1} parent=1 // pred_region
      _
    $region21: #{tpu_custom_call.1} parent=1 // pred_fallthru
      _
    %v22 = vld [vmem:[%s0] sm:$0xff]
    %v23 = vld [vmem:[%s0 + $0x8] sm:$0xff]
    %v24 = vld [vmem:[%s0 + $0x10] sm:$0xff]
    %v25 = vld [vmem:[%s0 + $0x18] sm:$0xff]
    %v26 = vld [vmem:[%s0 + $0x20] sm:$0xff]
    %v27 = vld [vmem:[%s0 + $0x28] sm:$0xff]
    %v28 = vld [vmem:[%s0 + $0x30] sm:$0xff]
    %v29 = vld [vmem:[%s0 + $0x38] sm:$0xff]
    %v30 = vld [vmem:[%s0 + $0x40] sm:$0xff]
    %v31 = vld [vmem:[%s0 + $0x48] sm:$0xff]
    %v32 = vld [vmem:[%s0 + $0x50] sm:$0xff]
    %v33 = vld [vmem:[%s0 + $0x58] sm:$0xff]
    %v34 = vld [vmem:[%s0 + $0x60] sm:$0xff]
    %v35 = vld [vmem:[%s0 + $0x68] sm:$0xff]
    %v36 = vld [vmem:[%s0 + $0x70] sm:$0xff]
    %v37 = vld [vmem:[%s0 + $0x78] sm:$0xff]
    %v38 = vld [vmem:[%s1] sm:$0xff]
    %v39 = vld [vmem:[%s1 + $0x8] sm:$0xff]
    %v40 = vld [vmem:[%s1 + $0x10] sm:$0xff]
    %v41 = vld [vmem:[%s1 + $0x18] sm:$0xff]
    %v42 = vld [vmem:[%s1 + $0x20] sm:$0xff]
    %v43 = vld [vmem:[%s1 + $0x28] sm:$0xff]
    %v44 = vld [vmem:[%s1 + $0x30] sm:$0xff]
    %v45 = vld [vmem:[%s1 + $0x38] sm:$0xff]
    %v46 = vld [vmem:[%s1 + $0x40] sm:$0xff]
    %v47 = vld [vmem:[%s1 + $0x48] sm:$0xff]
    %v48 = vld [vmem:[%s1 + $0x50] sm:$0xff]
    %v49 = vld [vmem:[%s1 + $0x58] sm:$0xff]
    %v50 = vld [vmem:[%s1 + $0x60] sm:$0xf]
    %v51 = vld [vmem:[%s2] sm:$0xff]
    %v52 = vld [vmem:[%s2 + $0x8] sm:$0xff]
    %v53 = vld [vmem:[%s2 + $0x10] sm:$0xff]
    %v54 = vld [vmem:[%s2 + $0x18] sm:$0xff]
    %v55 = vld [vmem:[%s2 + $0x20] sm:$0xff]
    %v56 = vld [vmem:[%s2 + $0x28] sm:$0xff]
    %v57 = vld [vmem:[%s2 + $0x30] sm:$0xff]
    %v58 = vld [vmem:[%s2 + $0x38] sm:$0xff]
    %v59 = vld [vmem:[%s2 + $0x40] sm:$0xff]
    %v60 = vld [vmem:[%s2 + $0x48] sm:$0xff]
    %v61 = vld [vmem:[%s2 + $0x50] sm:$0xff]
    %v62 = vld [vmem:[%s2 + $0x58] sm:$0xff]
    %v63 = vld [vmem:[%s2 + $0x60] sm:$0xf]
    %65 = vset.pattern.permute.xlu0 0
    %66 = vperm.xlu0 %65, %v51
    %v67 = vpop.permute.xlu0 %66
    %70 = vset.pattern.permute.xlu0 0
    %71 = vperm.xlu0 %70, %v52
    %v72 = vpop.permute.xlu0 %71
    %75 = vset.pattern.permute.xlu0 0
    %76 = vperm.xlu0 %75, %v53
    %v77 = vpop.permute.xlu0 %76
    %80 = vset.pattern.permute.xlu0 0
    %81 = vperm.xlu0 %80, %v54
    %v82 = vpop.permute.xlu0 %81
    %85 = vset.pattern.permute.xlu0 0
    %86 = vperm.xlu0 %85, %v55
    %v87 = vpop.permute.xlu0 %86
    %90 = vset.pattern.permute.xlu0 0
    %91 = vperm.xlu0 %90, %v56
    %v92 = vpop.permute.xlu0 %91
    %95 = vset.pattern.permute.xlu0 0
    %96 = vperm.xlu0 %95, %v57
    %v97 = vpop.permute.xlu0 %96
    %100 = vset.pattern.permute.xlu0 0
    %101 = vperm.xlu0 %100, %v58
    %v102 = vpop.permute.xlu0 %101
    %105 = vset.pattern.permute.xlu0 0
    %106 = vperm.xlu0 %105, %v59
    %v107 = vpop.permute.xlu0 %106
    %110 = vset.pattern.permute.xlu0 0
    %111 = vperm.xlu0 %110, %v60
    %v112 = vpop.permute.xlu0 %111
    %115 = vset.pattern.permute.xlu0 0
    %116 = vperm.xlu0 %115, %v61
    %v117 = vpop.permute.xlu0 %116
    %120 = vset.pattern.permute.xlu0 0
    %121 = vperm.xlu0 %120, %v62
    %v122 = vpop.permute.xlu0 %121
    %125 = vset.pattern.permute.xlu0 0
    %126 = vperm.xlu0 %125, %v63
    %v127 = vpop.permute.xlu0 %126
    %vm129 = vcmask 105472
    %v131 = vsel %vm129, %v38, 0
    %v134 = vsel %vm129, %v39, 0
    %v137 = vsel %vm129, %v40, 0
    %v140 = vsel %vm129, %v41, 0
    %v143 = vsel %vm129, %v42, 0
    %v146 = vsel %vm129, %v43, 0
    %v149 = vsel %vm129, %v44, 0
    %v152 = vsel %vm129, %v45, 0
    %v155 = vsel %vm129, %v46, 0
    %v158 = vsel %vm129, %v47, 0
    %v161 = vsel %vm129, %v48, 0
    %v164 = vsel %vm129, %v49, 0
    %v167 = vsel %vm129, %v50, 0
    %v170 = vsel %vm129, %v22, 0
    %v173 = vsel %vm129, %v23, 0
    %v176 = vsel %vm129, %v24, 0
    %v179 = vsel %vm129, %v25, 0
    %v182 = vsel %vm129, %v26, 0
    %v185 = vsel %vm129, %v27, 0
    %v188 = vsel %vm129, %v28, 0
    %v191 = vsel %vm129, %v29, 0
    %v194 = vsel %vm129, %v30, 0
    %v197 = vsel %vm129, %v31, 0
    %v200 = vsel %vm129, %v32, 0
    %v203 = vsel %vm129, %v33, 0
    %v206 = vsel %vm129, %v34, 0
    %v209 = vsel %vm129, %v35, 0
    %v212 = vsel %vm129, %v36, 0
    %v215 = vsel %vm129, %v37, 0
    %217 = vmatpush.xpose.msra.mxu0 %v215
    %218 = vmatpush.xpose.msra.mxu0 %v212
    %219 = vmatpush.xpose.msra.mxu0 %v209
    %220 = vmatpush.xpose.msra.mxu0 %v206
    %221 = vmatpush.xpose.msra.mxu0 %v203
    %222 = vmatpush.xpose.msra.mxu0 %v200
    %223 = vmatpush.xpose.msra.mxu0 %v197
    %224 = vmatpush.xpose.msra.mxu0 %v194
    %225 = vmatpush.xpose.msra.mxu0 %v191
    %226 = vmatpush.xpose.msra.mxu0 %v188
    %227 = vmatpush.xpose.msra.mxu0 %v185
    %228 = vmatpush.xpose.msra.mxu0 %v182
    %229 = vmatpush.xpose.msra.mxu0 %v179
    %230 = vmatpush.xpose.msra.mxu0 %v176
    %231 = vmatpush.xpose.msra.mxu0 %v173
    %232 = vmatpush.xpose.msra.mxu0 %v170
    %233 = vmatmul.f32.gmra.mxu0 %v131
    %v234 = vpop.f32.mrf.mxu0
    %v235 = vadd.f32 %v67, %v234
    %236 = vmatmul.f32.gmra.mxu0 %v134
    %v237 = vpop.f32.mrf.mxu0
    %v238 = vadd.f32 %v72, %v237
    %239 = vmatmul.f32.gmra.mxu0 %v137
    %v240 = vpop.f32.mrf.mxu0
    %v241 = vadd.f32 %v77, %v240
    %242 = vmatmul.f32.gmra.mxu0 %v140
    %v243 = vpop.f32.mrf.mxu0
    %v244 = vadd.f32 %v82, %v243
    %245 = vmatmul.f32.gmra.mxu0 %v143
    %v246 = vpop.f32.mrf.mxu0
    %v247 = vadd.f32 %v87, %v246
    %248 = vmatmul.f32.gmra.mxu0 %v146
    %v249 = vpop.f32.mrf.mxu0
    %v250 = vadd.f32 %v92, %v249
    %251 = vmatmul.f32.gmra.mxu0 %v149
    %v252 = vpop.f32.mrf.mxu0
    %v253 = vadd.f32 %v97, %v252
    %254 = vmatmul.f32.gmra.mxu0 %v152
    %v255 = vpop.f32.mrf.mxu0
    %v256 = vadd.f32 %v102, %v255
    %257 = vmatmul.f32.gmra.mxu0 %v155
    %v258 = vpop.f32.mrf.mxu0
    %v259 = vadd.f32 %v107, %v258
    %260 = vmatmul.f32.gmra.mxu0 %v158
    %v261 = vpop.f32.mrf.mxu0
    %v262 = vadd.f32 %v112, %v261
    %263 = vmatmul.f32.gmra.mxu0 %v161
    %v264 = vpop.f32.mrf.mxu0
    %v265 = vadd.f32 %v117, %v264
    %266 = vmatmul.f32.gmra.mxu0 %v164
    %v267 = vpop.f32.mrf.mxu0
    %v268 = vadd.f32 %v122, %v267
    %269 = vmatmul.f32.gmra.mxu0 %v167
    %v270 = vpop.f32.mrf.mxu0
    %v271 = vadd.f32 %v127, %v270
    %272 = vdwg.mxu0
    %v273 = vmax.f32 %v235, 0.0
    %v274 = vmax.f32 %v238, 0.0
    %v275 = vmax.f32 %v241, 0.0
    %v276 = vmax.f32 %v244, 0.0
    %v277 = vmax.f32 %v247, 0.0
    %v278 = vmax.f32 %v250, 0.0
    %v279 = vmax.f32 %v253, 0.0
    %v280 = vmax.f32 %v256, 0.0
    %v281 = vmax.f32 %v259, 0.0
    %v282 = vmax.f32 %v262, 0.0
    %v283 = vmax.f32 %v265, 0.0
    %v284 = vmax.f32 %v268, 0.0
    %v285 = vmax.f32 %v271, 0.0
    %v286 = vld [vmem:[%s3] sm:$0x1]
    %s287 = sld [smem:[#allocation2]]
    %v288 = vstv %s287
    %vm289 = vcmask 818176
    %v291 = vsel %vm289, %v286, 0
    %vm293 = vcmask 1043456
    %v295 = vsel %vm293, %v285, 0
    %297 = vmatpush.msra.mxu0 0.0
    %298 = vmatpush.msra.mxu0 0.0
    %299 = vmatpush.msra.mxu0 0.0
    %300 = vmatpush.msra.mxu0 %v295
    %301 = vmatpush.msra.mxu0 %v284
    %302 = vmatpush.msra.mxu0 %v283
    %303 = vmatpush.msra.mxu0 %v282
    %304 = vmatpush.msra.mxu0 %v281
    %305 = vmatpush.msra.mxu0 %v280
    %306 = vmatpush.msra.mxu0 %v279
    %307 = vmatpush.msra.mxu0 %v278
    %308 = vmatpush.msra.mxu0 %v277
    %309 = vmatpush.msra.mxu0 %v276
    %310 = vmatpush.msra.mxu0 %v275
    %311 = vmatpush.msra.mxu0 %v274
    %312 = vmatpush.msra.mxu0 %v273
    %313 = vmatmul.f32.gmra.mxu0 %v291
    %v314 = vpop.f32.mrf.mxu0
    %v315 = vadd.f32 %v288, %v314
    %316 = vdwg.mxu0
    %317 = vst [vmem:[#allocation3] sm:$0x1] %v315
    // Predicated region
    $region22: #{tpu_custom_call.1} parent=1 // pred_check
      _
    $region23: #{tpu_custom_call.1} parent=1 // pred_check_branch
      %319 = sbr.rel (0) target = $region25
    $region24: #{tpu_custom_call.1} parent=1 // pred_region
      %321 = vsyncadd [#allocation4], 0
      %s323 = sshll.u32 [#allocation3], 4
      %s324 = int_to_ptr.vmem [resolvable:$true] %s323
      %s325 = sshll.u32 %s5, 4
      %s326 = int_to_ptr.hbm [resolvable:$true] %s325
      %328 = dma.vmem_to_hbm [thread:$0]  %s324, 16, %s326, [#allocation4]
    $region25: #{tpu_custom_call.1} parent=1 // pred_fallthru
      _
    // Predicated region
    $region26: #{tpu_custom_call.1} parent=1 // pred_check
      _
    $region27: #{tpu_custom_call.1} parent=1 // pred_check_branch
      %330 = sbr.rel (0) target = $region29
    $region28: #{tpu_custom_call.1} parent=1 // pred_region
      %332 = dma.done [#allocation4], 16
    $region29: #{tpu_custom_call.1} parent=1 // pred_fallthru
      _
    %333 = vsyncpa [#allocation4], 1

</llo_original>
